<compile_context>
chip_gen: v7x
topology: tpu7x:2x2x1
jax: 0.10.0
libtpu: 0.0.40
codegen_flags: <defaults>
</compile_context>

<pallas_src>
import math

import numpy as np
import jax
import jax.numpy as jnp
from jax import lax
from jax.experimental import pallas as pl
from jax.experimental.pallas import tpu as pltpu


# ---------------------------------------------------------------------------
# helpers
# ---------------------------------------------------------------------------
def _row_tile(n, cap=512):
    """Pick a row-tile size <= cap that is a multiple of 8 (or the full n)."""
    if n <= cap:
        return n
    for t in (512, 384, 256, 128, 64, 32, 16, 8):
        if t <= cap and n % t == 0:
            return t
    return cap  # cdiv grid + masked edge block


_VMEM_LIMIT = 64 * 1024 * 1024  # safe on v5e/v6e (128 MiB) and v7x (64 MiB)


# ---------------------------------------------------------------------------
# Row-tiled linear kernels (x @ W^T + b), bf16 MXU operands, f32 accumulate.
# The masked variant fuses value.masked_fill(v_mask[..., None], 0).
# ---------------------------------------------------------------------------
def _linear_kernel(x_ref, w_ref, b_ref, o_ref):
    y = jnp.dot(x_ref[...].astype(jnp.bfloat16),
                w_ref[...].astype(jnp.bfloat16),
                preferred_element_type=jnp.float32) + b_ref[...]
    o_ref[...] = y.astype(o_ref.dtype)


def _masked_linear_kernel(x_ref, w_ref, b_ref, m_ref, o_ref):
    y = jnp.dot(x_ref[...].astype(jnp.bfloat16),
                w_ref[...].astype(jnp.bfloat16),
                preferred_element_type=jnp.float32) + b_ref[...]
    y = jnp.where(m_ref[...] > 0.5, 0.0, y)
    o_ref[...] = y.astype(o_ref.dtype)


def pallas_linear(x, w, b, *, mask=None, out_dtype=jnp.float32, row_cap=512):
    """x: (N, in); w: (out, in) [PyTorch layout]; b: (out,); mask: (N,) or None."""
    n, kdim = x.shape
    out_dim = w.shape[0]
    tm = _row_tile(n, row_cap)
    grid = (pl.cdiv(n, tm),)

    in_specs = [pl.BlockSpec((tm, kdim), lambda i: (i, 0)),
                pl.BlockSpec((kdim, out_dim), lambda i: (0, 0)),
                pl.BlockSpec((1, out_dim), lambda i: (0, 0))]
    args = [x.astype(jnp.float32),
            jnp.transpose(w).astype(jnp.float32),
            b.reshape(1, out_dim).astype(jnp.float32)]
    kernel = _linear_kernel
    if mask is not None:
        in_specs.append(pl.BlockSpec((tm, 1), lambda i: (i, 0)))
        args.append(mask.reshape(n, 1).astype(jnp.float32))
        kernel = _masked_linear_kernel

    return pl.pallas_call(
        kernel,
        grid=grid,
        in_specs=in_specs,
        out_specs=pl.BlockSpec((tm, out_dim), lambda i: (i, 0)),
        out_shape=jax.ShapeDtypeStruct((n, out_dim), out_dtype),
        compiler_params=pltpu.CompilerParams(
            dimension_semantics=("parallel",),
            vmem_limit_bytes=_VMEM_LIMIT),
    )(*args)


# ---------------------------------------------------------------------------
# Fused query-side kernel:
#   [sampling_offsets | attention_weights] projection (one matmul)
#   + per-head softmax over (L*P)
#   + sampling-location math: loc = (ref[:2] + off/8 * ref[2:]) * valid_ratio
#   -> packed lane-dense output [loc_x (H*L*P) | loc_y (H*L*P) | attn (H*L*P)]
# ---------------------------------------------------------------------------
def _make_qside_kernel(num_head, num_level, num_point):
    H, L, P = num_head, num_level, num_point
    LP = L * P
    HLP = H * LP

    def kernel(x_ref, w_ref, b_ref, refw_ref, vr_ref, o_ref):
        y = jnp.dot(x_ref[...].astype(jnp.bfloat16),
                    w_ref[...].astype(jnp.bfloat16),
                    preferred_element_type=jnp.float32) + b_ref[...]
        tm = y.shape[0]
        off_x = y[:, :HLP]                    # (tm, HLP), (h,l,p) order
        off_y = y[:, HLP:2 * HLP]

        refw = refw_ref[...]                  # (tm, 4): cx, cy, w, h
        cx, cy = refw[:, 0:1], refw[:, 1:2]
        rw, rh = refw[:, 2:3], refw[:, 3:4]

        # per-level valid ratios broadcast to (tm, HLP) without strided slices
        vr = vr_ref[...]                      # (tm, 2L): [vx_0..vx_{L-1}|vy_...]
        vrx_lp = jnp.concatenate(
            [jnp.broadcast_to(vr[:, l:l + 1], (tm, P)) for l in range(L)], axis=1)
        vry_lp = jnp.concatenate(
            [jnp.broadcast_to(vr[:, L + l:L + l + 1], (tm, P)) for l in range(L)],
            axis=1)
        vrx = jnp.concatenate([vrx_lp] * H, axis=1)   # (tm, HLP)
        vry = jnp.concatenate([vry_lp] * H, axis=1)

        loc_x = (cx + off_x * 0.125 * rw) * vrx
        loc_y = (cy + off_y * 0.125 * rh) * vry

        attn_parts = []
        for h in range(H):                    # unrolled; H is small
            s = 2 * HLP + h * LP
            lg = y[:, s:s + LP]
            m = jnp.max(lg, axis=-1, keepdims=True)
            e = jnp.exp(lg - m)
            attn_parts.append(e / jnp.sum(e, axis=-1, keepdims=True))

        o_ref[...] = jnp.concatenate([loc_x, loc_y] + attn_parts, axis=-1)

    return kernel


def pallas_qside(q_flat, refw_flat, vr_flat, w_off, b_off, w_att, b_att, *,
                 num_head, num_level, num_point):
    """q_flat: (N, q_dim) -> (N, 3*H*L*P) packed [loc_x | loc_y | attn]."""
    n, q_dim = q_flat.shape
    H, L, P = num_head, num_level, num_point
    HLP = H * L * P
    out_dim = 3 * HLP

    # permute offset output rows so all x-offsets come first, then all y-offsets
    perm = np.concatenate([np.arange(HLP) * 2, np.arange(HLP) * 2 + 1])
    w_cat = jnp.concatenate([w_off[perm], w_att], axis=0)   # (3*HLP, q_dim)
    b_cat = jnp.concatenate([b_off[perm], b_att], axis=0)   # (3*HLP,)

    tm = _row_tile(n, 512)
    kernel = _make_qside_kernel(H, L, P)

    return pl.pallas_call(
        kernel,
        grid=(pl.cdiv(n, tm),),
        in_specs=[pl.BlockSpec((tm, q_dim), lambda i: (i, 0)),
                  pl.BlockSpec((q_dim, out_dim), lambda i: (0, 0)),
                  pl.BlockSpec((1, out_dim), lambda i: (0, 0)),
                  pl.BlockSpec((tm, 4), lambda i: (i, 0)),
                  pl.BlockSpec((tm, 2 * L), lambda i: (i, 0))],
        out_specs=pl.BlockSpec((tm, out_dim), lambda i: (i, 0)),
        out_shape=jax.ShapeDtypeStruct((n, out_dim), jnp.float32),
        compiler_params=pltpu.CompilerParams(
            dimension_semantics=("parallel",),
            vmem_limit_bytes=_VMEM_LIMIT),
    )(q_flat.astype(jnp.float32),
      jnp.transpose(w_cat).astype(jnp.float32),
      b_cat.reshape(1, out_dim).astype(jnp.float32),
      refw_flat.astype(jnp.float32),
      vr_flat.astype(jnp.float32))


# ---------------------------------------------------------------------------
# Multi-scale deformable sampling core (BoxAttnFunction equivalent), heads
# fused, out_proj fused into the epilogue.  Bilinear gather (align_corners=
# False, zero padding) is a vectorized one-hot accumulation feeding one bf16
# MXU matmul per (level, head).
# ---------------------------------------------------------------------------
def _make_sampling_kernel(level_shapes, level_starts, num_level, num_head,
                          num_point, head_dim):
    L, H, P, HD = num_level, num_head, num_point, head_dim
    LP = L * P
    HLP = H * LP

    def kernel(val_ref, side_ref, wout_ref, bout_ref, out_ref):
        val = val_ref[0, :, :]            # (Lv, v_dim)   bf16
        side = side_ref[0, :, :]          # (lq, 3*HLP)   f32
        lq = side.shape[0]
        locx = side[:, :HLP]
        locy = side[:, HLP:2 * HLP]
        attn = side[:, 2 * HLP:]          # already softmaxed

        accs = [jnp.zeros((lq, HD), jnp.float32) for _ in range(H)]
        for li in range(L):
            lh, lw = level_shapes[li]
            start = level_starts[li]
            hw = lh * lw
            val_lvl = val[start:start + hw, :]                    # (hw, v_dim)
            cols = lax.broadcasted_iota(jnp.int32, (lq, hw), 1)   # hoisted/head
            for h in range(H):
                base = h * LP + li * P
                x = locx[:, base:base + P] * lw - 0.5             # (lq, P)
                y = locy[:, base:base + P] * lh - 0.5
                a = attn[:, base:base + P]

                x0 = jnp.floor(x)
                y0 = jnp.floor(y)
                lx = x - x0
                ly = y - y0
                x0i = x0.astype(jnp.int32)
                y0i = y0.astype(jnp.int32)

                # 4 bilinear corners vectorized into (lq, 4P)
                xi = jnp.concatenate([x0i, x0i + 1, x0i, x0i + 1], axis=1)
                yi = jnp.concatenate([y0i, y0i, y0i + 1, y0i + 1], axis=1)
                wx = jnp.concatenate([1.0 - lx, lx, 1.0 - lx, lx], axis=1)
                wy = jnp.concatenate([1.0 - ly, 1.0 - ly, ly, ly], axis=1)
                aa = jnp.concatenate([a, a, a, a], axis=1)
                valid = (xi >= 0) & (xi < lw) & (yi >= 0) & (yi < lh)
                wgt = jnp.where(valid, aa * wx * wy, 0.0)          # (lq, 4P)
                idx = yi * lw + xi                                  # (lq, 4P)

                comb = jnp.zeros((lq, hw), jnp.float32)
                for k in range(4 * P):                              # unrolled
                    comb = comb + jnp.where(cols == idx[:, k:k + 1],
                                            wgt[:, k:k + 1], 0.0)

                accs[h] = accs[h] + jnp.dot(
                    comb.astype(jnp.bfloat16),
                    val_lvl[:, h * HD:(h + 1) * HD],
                    preferred_element_type=jnp.float32)

        sampled = jnp.concatenate(accs, axis=-1)                    # (lq, v_dim)
        # fused out_proj epilogue: sampled never round-trips HBM
        out = jnp.dot(sampled.astype(jnp.bfloat16),
                      wout_ref[...].astype(jnp.bfloat16),
                      preferred_element_type=jnp.float32) + bout_ref[...]
        out_ref[0, :, :] = out.astype(out_ref.dtype)

    return kernel


def ms_deformable_sample_outproj(value, side, w_out_t, b_out,
                                 level_shapes, level_starts, *,
                                 num_level, num_head, num_point, head_dim,
                                 q_dim):
    """value: (B, Lv, v_dim) bf16; side: (B, Lq, 3*H*L*P) f32;
    w_out_t: (v_dim, q_dim); b_out: (1, q_dim) -> (B, Lq, q_dim) f32."""
    b, lv, v_dim = value.shape
    lq = side.shape[1]
    side_w = side.shape[2]
    lq_tile = _row_tile(lq, 128)
    kernel = _make_sampling_kernel(level_shapes, level_starts,
                                   num_level, num_head, num_point, head_dim)
    grid = (b, pl.cdiv(lq, lq_tile))
    return pl.pallas_call(
        kernel,
        grid=grid,
        in_specs=[
            pl.BlockSpec((1, lv, v_dim), lambda bi, qi: (bi, 0, 0)),
            pl.BlockSpec((1, lq_tile, side_w), lambda bi, qi: (bi, qi, 0)),
            pl.BlockSpec((v_dim, q_dim), lambda bi, qi: (0, 0)),
            pl.BlockSpec((1, q_dim), lambda bi, qi: (0, 0)),
        ],
        out_specs=pl.BlockSpec((1, lq_tile, q_dim), lambda bi, qi: (bi, qi, 0)),
        out_shape=jax.ShapeDtypeStruct((b, lq, q_dim), jnp.float32),
        compiler_params=pltpu.CompilerParams(
            dimension_semantics=("parallel", "parallel"),
            vmem_limit_bytes=_VMEM_LIMIT),
    )(value, side, w_out_t, b_out)


# ---------------------------------------------------------------------------
# Parameter initialization mirroring DeformableAttention._reset_parameters
# ---------------------------------------------------------------------------
def init_params(key, q_dim, v_dim, num_level, num_head, num_point):
    k1, k2 = jax.random.split(key)

    def xavier_normal(k, out_dim, in_dim):
        std = math.sqrt(2.0 / (in_dim + out_dim))
        return jax.random.normal(k, (out_dim, in_dim), jnp.float32) * std

    thetas = jnp.arange(num_head, dtype=jnp.float32) * (2.0 * math.pi / num_head)
    grid = jnp.stack([jnp.cos(thetas), jnp.sin(thetas)], -1)          # (H, 2)
    grid = grid / jnp.max(jnp.abs(grid), axis=-1, keepdims=True)
    grid = jnp.tile(grid.reshape(num_head, 1, 1, 2),
                    (1, num_level, num_point, 1))
    grid = grid * jnp.arange(1, num_point + 1,
                             dtype=jnp.float32).reshape(1, 1, num_point, 1)

    return dict(
        sampling_offsets_weight=jnp.zeros(
            (num_head * num_level * num_point * 2, q_dim), jnp.float32),
        sampling_offsets_bias=grid.reshape(-1),
        attention_weights_weight=jnp.zeros(
            (num_head * num_level * num_point, q_dim), jnp.float32),
        attention_weights_bias=jnp.zeros(
            (num_head * num_level * num_point,), jnp.float32),
        value_proj_weight=xavier_normal(k1, v_dim, v_dim),
        value_proj_bias=jnp.zeros((v_dim,), jnp.float32),
        out_proj_weight=xavier_normal(k2, q_dim, v_dim),
        out_proj_bias=jnp.zeros((q_dim,), jnp.float32),
    )


# ---------------------------------------------------------------------------
# Full forward, matching DeformableAttention.forward semantics.
# ---------------------------------------------------------------------------
def deformable_attention_forward(params, query, value, v_shape, v_start_index,
                                 v_mask, v_valid_ratios, ref_windows,
                                 *, num_level, num_head, num_point):
    b, l1, q_dim = query.shape
    l2, v_dim = value.shape[1], value.shape[2]
    head_dim = v_dim // num_head
    H, L, P = num_head, num_level, num_point
    HLP = H * L * P

    # value = value_proj(value); masked_fill fused; bf16 output for the sampler
    mask_flat = None if v_mask is None else v_mask.reshape(b * l2)
    v_proj = pallas_linear(value.reshape(b * l2, v_dim),
                           params["value_proj_weight"],
                           params["value_proj_bias"],
                           mask=mask_flat,
                           out_dtype=jnp.bfloat16).reshape(b, l2, v_dim)

    # query-side fused projection + softmax + sampling-location packing
    refw_flat = ref_windows[..., :4].reshape(b * l1, 4)
    if v_valid_ratios is None:
        vr_flat = jnp.ones((b * l1, 2 * L), jnp.float32)
    else:
        # TODO(synk): assumes valid ratios are per (batch, level, xy) — the
        # standard deformable-DETR shape (b, 1, 1, L, 1, 2) — not per query/head.
        vr = jnp.asarray(v_valid_ratios, jnp.float32).reshape(b, L, 2)
        vr_row = jnp.concatenate([vr[..., 0], vr[..., 1]], axis=-1)   # (b, 2L)
        vr_flat = jnp.broadcast_to(vr_row[:, None, :],
                                   (b, l1, 2 * L)).reshape(b * l1, 2 * L)

    side = pallas_qside(query.reshape(b * l1, q_dim), refw_flat, vr_flat,
                        params["sampling_offsets_weight"],
                        params["sampling_offsets_bias"],
                        params["attention_weights_weight"],
                        params["attention_weights_bias"],
                        num_head=H, num_level=L, num_point=P)  # (n, 3*HLP)

    attention_weights = side[:, 2 * HLP:].reshape(b, l1, H, L, P)
    side = side.reshape(b, l1, 3 * HLP)

    level_shapes = [(int(h_), int(w_)) for h_, w_ in np.asarray(v_shape)]
    level_starts = [int(s) for s in np.asarray(v_start_index)]

    w_out_t = jnp.transpose(params["out_proj_weight"]).astype(jnp.float32)
    b_out = params["out_proj_bias"].reshape(1, q_dim).astype(jnp.float32)

    output = ms_deformable_sample_outproj(
        v_proj, side, w_out_t, b_out, level_shapes, level_starts,
        num_level=L, num_head=H, num_point=P, head_dim=head_dim,
        q_dim=q_dim)                                            # (b, l1, q_dim)

    return output, attention_weights


if __name__ == "__main__":
    key = jax.random.PRNGKey(0)
    b, l1 = 2, 8
    q_dim = v_dim = 32
    num_head, num_level, num_point = 4, 2, 4

    shapes = np.array([[16, 16], [8, 8]], dtype=np.int64)        # (H, W) per level
    starts = np.array([0, 256], dtype=np.int64)
    l2 = int((shapes[:, 0] * shapes[:, 1]).sum())                # 320

    kq, kv, kr, km, kvr, kp = jax.random.split(key, 6)
    query = jax.random.normal(kq, (b, l1, q_dim), jnp.float32)
    value = jax.random.normal(kv, (b, l2, v_dim), jnp.float32)
    ref_windows = jnp.concatenate([
        jax.random.uniform(kr, (b, l1, 2), minval=0.2, maxval=0.8),
        jax.random.uniform(jax.random.fold_in(kr, 1), (b, l1, 2),
                           minval=0.1, maxval=0.3),
    ], axis=-1).astype(jnp.float32)
    v_mask = jax.random.bernoulli(km, 0.1, (b, l2))
    v_valid_ratios = jax.random.uniform(
        kvr, (b, 1, 1, num_level, 1, 2), minval=0.85, maxval=1.0
    ).astype(jnp.float32)

    params = init_params(kp, q_dim, v_dim, num_level, num_head, num_point)

    out, attn = deformable_attention_forward(
        params, query, value, shapes, starts, v_mask, v_valid_ratios,
        ref_windows, num_level=num_level, num_head=num_head,
        num_point=num_point)
    jax.block_until_ready((out, attn))

    assert out.shape == (b, l1, q_dim)
    assert attn.shape == (b, l1, num_head, num_level, num_point)
    assert bool(jnp.all(jnp.isfinite(out))) and bool(jnp.all(jnp.isfinite(attn)))
    print("KERNEL_OK")
</pallas_src>

<mosaic_0001>
module attributes {stable_mosaic.version = 11 : i64} {
  func.func @_masked_linear_kernel(%arg0: i32, %arg1: memref<128x32xf32, #tpu.memory_space<vmem>>, %arg2: memref<32x32xf32, #tpu.memory_space<vmem>>, %arg3: memref<1x32xf32, #tpu.memory_space<vmem>>, %arg4: memref<128x1xf32, #tpu.memory_space<vmem>>, %arg5: memref<128x32xbf16, #tpu.memory_space<vmem>>) attributes {dimension_semantics = [#tpu.dimension_semantics<parallel>], iteration_bounds = array<i64: 5>, scalar_prefetch = 0 : i64, scratch_operands = 0 : i64, tpu.core_type = #tpu.core_type<tc>, window_params = [{transform_indices = @transform_0, window_bounds = array<i64: 128, 32>}, {pipeline_mode = #tpu.pipeline_mode<synchronous>, transform_indices = @transform_1, window_bounds = array<i64: 32, 32>}, {pipeline_mode = #tpu.pipeline_mode<synchronous>, transform_indices = @transform_2, window_bounds = array<i64: 1, 32>}, {transform_indices = @transform_3, window_bounds = array<i64: 128, 1>}, {transform_indices = @transform_4, window_bounds = array<i64: 128, 32>}]} {
    %c0 = arith.constant 0 : index
    %c0_0 = arith.constant 0 : index
    %0 = vector.load %arg1[%c0, %c0_0] : memref<128x32xf32, #tpu.memory_space<vmem>>, vector<128x32xf32>
    %1 = arith.truncf %0 : vector<128x32xf32> to vector<128x32xbf16>
    %c0_1 = arith.constant 0 : index
    %c0_2 = arith.constant 0 : index
    %2 = vector.load %arg2[%c0_1, %c0_2] : memref<32x32xf32, #tpu.memory_space<vmem>>, vector<32x32xf32>
    %3 = arith.truncf %2 : vector<32x32xf32> to vector<32x32xbf16>
    %cst = arith.constant dense<0.000000e+00> : vector<128x32xf32>
    %4 = tpu.matmul %1, %3, %cst {dimension_numbers = #tpu.dot_dimension_numbers<[1], [0], [0], [1], [0, 0, 1, 1], [], []>} : vector<128x32xbf16>, vector<32x32xbf16>, vector<128x32xf32> -> vector<128x32xf32>
    %c0_3 = arith.constant 0 : index
    %c0_4 = arith.constant 0 : index
    %5 = vector.load %arg3[%c0_3, %c0_4] : memref<1x32xf32, #tpu.memory_space<vmem>>, vector<1x32xf32>
    %6 = vector.broadcast %5 : vector<1x32xf32> to vector<128x32xf32>
    %7 = arith.addf %4, %6 : vector<128x32xf32>
    %c0_5 = arith.constant 0 : index
    %c0_6 = arith.constant 0 : index
    %8 = vector.load %arg4[%c0_5, %c0_6] : memref<128x1xf32, #tpu.memory_space<vmem>>, vector<128x1xf32>
    %cst_7 = arith.constant 5.000000e-01 : f32
    %9 = vector.broadcast %cst_7 : f32 to vector<128x1xf32>
    %10 = arith.cmpf ogt, %8, %9 : vector<128x1xf32>
    %cst_8 = arith.constant 0.000000e+00 : f32
    %11 = vector.shape_cast %10 : vector<128x1xi1> to vector<128x1xi1>
    %12 = vector.broadcast %11 : vector<128x1xi1> to vector<128x32xi1>
    %13 = vector.broadcast %cst_8 : f32 to vector<128x32xf32>
    %14 = arith.select %12, %13, %7 : vector<128x32xi1>, vector<128x32xf32>
    %15 = arith.truncf %14 : vector<128x32xf32> to vector<128x32xbf16>
    %c0_9 = arith.constant 0 : index
    %c0_10 = arith.constant 0 : index
    %16 = vector.load %arg5[%c0_9, %c0_10] : memref<128x32xbf16, #tpu.memory_space<vmem>>, vector<128x32xbf16>
    tpu.vector_store %arg5[%c0_9, %c0_10], %15 {strides = array<i32>} : memref<128x32xbf16, #tpu.memory_space<vmem>>, vector<128x32xbf16>,
    return
  }
  func.func @transform_0(%arg0: i32) -> (i32, i32) {
    %c0_i32 = arith.constant 0 : i32
    %c0_i32_0 = arith.constant 0 : i32
    return %arg0, %c0_i32 : i32, i32
  }
  func.func @transform_1(%arg0: i32) -> (i32, i32) {
    %c0_i32 = arith.constant 0 : i32
    %c0_i32_0 = arith.constant 0 : i32
    %c0_i32_1 = arith.constant 0 : i32
    return %c0_i32, %c0_i32_0 : i32, i32
  }
  func.func @transform_2(%arg0: i32) -> (i32, i32) {
    %c0_i32 = arith.constant 0 : i32
    %c0_i32_0 = arith.constant 0 : i32
    %c0_i32_1 = arith.constant 0 : i32
    return %c0_i32, %c0_i32_0 : i32, i32
  }
  func.func @transform_3(%arg0: i32) -> (i32, i32) {
    %c0_i32 = arith.constant 0 : i32
    %c0_i32_0 = arith.constant 0 : i32
    return %arg0, %c0_i32 : i32, i32
  }
  func.func @transform_4(%arg0: i32) -> (i32, i32) {
    %c0_i32 = arith.constant 0 : i32
    %c0_i32_0 = arith.constant 0 : i32
    return %arg0, %c0_i32 : i32, i32
  }
}

</mosaic_0001>

<llo_original>
// kernel: tpu_custom_call.1
$region0: #{tpu_custom_call.1}
  #allocation0 [shape = 'u32[]', space=smem, size = 0x4, offset = 0x4, fixed_abs, tag = 'smem constant byte address 0x4 - core index']
  #allocation1 [shape = 'u32[144,128]{1,0:T(1,128)}', space=vmem, size = 0x12000, scoped, tag = 'internal scratch']
  %s0 = inlined_call_operand.hbm [shape: f32[640,32], index: 0, kind: input, shape index: {}]
  %s1 = inlined_call_operand.hbm [shape: f32[32,32], index: 1, kind: input, shape index: {}]
  %s2 = inlined_call_operand.hbm [shape: f32[1,32], index: 2, kind: input, shape index: {}]
  %s3 = inlined_call_operand.hbm [shape: f32[640,1], index: 3, kind: input, shape index: {}]
  %s4 = inlined_call_operand.hbm [shape: bf16[640,32], index: 4, kind: output, shape index: {}]
  %s5 = sld [smem:[#allocation0]]
  $region65: #{tpu_custom_call.1} parent=0
    _
  %s7 = ssub.s32 1, %s5
  %s8 = scalar_select 0, %s7, %s5
  $region1: #{tpu_custom_call.1} parent=0
    #allocation2 [shape = 'u8[131072]{0}', space=vmem, size = 0x20000, scoped, tag = 'input window, operand 0']
    #allocation3 [shape = 's32[2]{0}', space=sflag, size = 0x8, scoped, tag = 'scoped memory for tpu_custom_call.1']
    #allocation4 [shape = 's32[2]{0}', space=sflag, size = 0x8, scoped, tag = 'scoped memory for tpu_custom_call.1']
    #allocation5 [shape = 'u8[16384]{0}', space=vmem, size = 0x4000, scoped, tag = 'input window, operand 1, single buffered']
    #allocation6 [shape = 's32[1]{0}', space=sflag, size = 0x4, scoped, tag = 'scoped memory for tpu_custom_call.1']
    #allocation7 [shape = 'u8[512]{0}', space=vmem, size = 0x400, scoped, tag = 'input window, operand 2, single buffered']
    #allocation8 [shape = 'u8[131072]{0}', space=vmem, size = 0x20000, scoped, tag = 'input window, operand 3']
    #allocation9 [shape = 's32[2]{0}', space=sflag, size = 0x8, scoped, tag = 'scoped memory for tpu_custom_call.1']
    #allocation10 [shape = 'u8[65536]{0}', space=vmem, size = 0x10000, scoped, tag = 'output window, operand 0']
    %9 = vsyncpa [#allocation3], 0
    %s10 = scalar_lea.sflag [#allocation3], 1
    %11 = vsyncpa %s10, 0
    %12 = vsyncpa [#allocation6], 0
    %13 = vsyncpa [#allocation9], 0
    %s14 = scalar_lea.sflag [#allocation9], 1
    %15 = vsyncpa %s14, 0
    %16 = vsyncpa [#allocation4], 0
    %s17 = scalar_lea.sflag [#allocation4], 1
    %18 = vsyncpa %s17, 0
    loop: start=0, step=1, limit=7
    $region2: #{tpu_custom_call.1} parent=1 // loop_pre_header
      _
    $region3: #{tpu_custom_call.1} parent=1 // loop_header
      %s20 = sphi 0, %s24
      %p21 = scmp.ge.s32.totalorder %s20, 7
      %s30 = sphi 0, %s32
      %s33 = sphi 0, %s30
      %s34 = sphi 0, %s33
      %s50 = sphi 0, %s34
      %s54 = sphi 0, %s54
      %s56 = sphi 0, %s54
      %s57 = sphi 0, %s56
      %s71 = sphi 0, %s57
      %s75 = sphi 0, %s75
      %s77 = sphi 0, %s75
      %s78 = sphi 0, %s77
      %s92 = sphi 0, %s78
      %s98 = sphi 0, %s100
      %s101 = sphi 0, %s98
      %s102 = sphi 0, %s101
      %s118 = sphi 0, %s102
      %s124 = sphi 0, %s126
      %s127 = sphi 0, %s124
      %s128 = sphi 0, %s127
      %s144 = sphi 0, %s128
    $region4: #{tpu_custom_call.1} parent=1 // loop_header_branch
      %23 = sbr.rel (%p21) target = $region8
    $region5: #{tpu_custom_call.1} parent=1 // loop_body
      %s25 = ssub.s32 %s20, 1
      %s26 = ssub.s32 %s20, 2
      %s27 = sadd.s32 %s20, 1
      %s28 = ssub.s32 %s20, %s27
      %p29 = scmp.eq.s32.totalorder %s28, 0
      %s31 = sadd.s32 %s30, 1
      %s32 = scalar_select %p29, %s30, %s31
      %p35 = pneg %p29
      %p36 = scmp.eq.s32.totalorder %s20, 4
      %p37 = por %p35, %p36
      %p38 = scmp.ne.s32.totalorder %s30, %s33
      %p39 = scmp.eq.s32.totalorder %s20, 0
      %p40 = por %p38, %p39
      %p41 = scmp.ne.s32.totalorder %s30, %s33
      %p42 = scmp.eq.s32.totalorder %s25, 4
      %p43 = por %p41, %p42
      %p44 = scmp.ne.s32.totalorder %s33, %s34
      %p45 = scmp.eq.s32.totalorder %s25, 0
      %p46 = por %p44, %p45
      %p47 = scmp.ne.s32.totalorder %s33, %s34
      %p48 = scmp.eq.s32.totalorder %s26, 4
      %p49 = por %p47, %p48
      %p51 = scmp.ne.s32.totalorder %s34, %s50
      %p52 = scmp.eq.s32.totalorder %s26, 0
      %p53 = por %p51, %p52
      %s55 = sadd.s32 %s54, 1
      %p58 = scmp.eq.s32.totalorder %s20, 4
      %p59 = scmp.ne.s32.totalorder %s54, %s56
      %p60 = scmp.eq.s32.totalorder %s20, 0
      %p61 = por %p59, %p60
      %p62 = scmp.ne.s32.totalorder %s54, %s56
      %p63 = scmp.eq.s32.totalorder %s25, 4
      %p64 = por %p62, %p63
      %p65 = scmp.ne.s32.totalorder %s56, %s57
      %p66 = scmp.eq.s32.totalorder %s25, 0
      %p67 = por %p65, %p66
      %p68 = scmp.ne.s32.totalorder %s56, %s57
      %p69 = scmp.eq.s32.totalorder %s26, 4
      %p70 = por %p68, %p69
      %p72 = scmp.ne.s32.totalorder %s57, %s71
      %p73 = scmp.eq.s32.totalorder %s26, 0
      %p74 = por %p72, %p73
      %s76 = sadd.s32 %s75, 1
      %p79 = scmp.eq.s32.totalorder %s20, 4
      %p80 = scmp.ne.s32.totalorder %s75, %s77
      %p81 = scmp.eq.s32.totalorder %s20, 0
      %p82 = por %p80, %p81
      %p83 = scmp.ne.s32.totalorder %s75, %s77
      %p84 = scmp.eq.s32.totalorder %s25, 4
      %p85 = por %p83, %p84
      %p86 = scmp.ne.s32.totalorder %s77, %s78
      %p87 = scmp.eq.s32.totalorder %s25, 0
      %p88 = por %p86, %p87
      %p89 = scmp.ne.s32.totalorder %s77, %s78
      %p90 = scmp.eq.s32.totalorder %s26, 4
      %p91 = por %p89, %p90
      %p93 = scmp.ne.s32.totalorder %s78, %s92
      %p94 = scmp.eq.s32.totalorder %s26, 0
      %p95 = por %p93, %p94
      %s96 = ssub.s32 %s20, %s27
      %p97 = scmp.eq.s32.totalorder %s96, 0
      %s99 = sadd.s32 %s98, 1
      %s100 = scalar_select %p97, %s98, %s99
      %p103 = pneg %p97
      %p104 = scmp.eq.s32.totalorder %s20, 4
      %p105 = por %p103, %p104
      %p106 = scmp.ne.s32.totalorder %s98, %s101
      %p107 = scmp.eq.s32.totalorder %s20, 0
      %p108 = por %p106, %p107
      %p109 = scmp.ne.s32.totalorder %s98, %s101
      %p110 = scmp.eq.s32.totalorder %s25, 4
      %p111 = por %p109, %p110
      %p112 = scmp.ne.s32.totalorder %s101, %s102
      %p113 = scmp.eq.s32.totalorder %s25, 0
      %p114 = por %p112, %p113
      %p115 = scmp.ne.s32.totalorder %s101, %s102
      %p116 = scmp.eq.s32.totalorder %s26, 4
      %p117 = por %p115, %p116
      %p119 = scmp.ne.s32.totalorder %s102, %s118
      %p120 = scmp.eq.s32.totalorder %s26, 0
      %p121 = por %p119, %p120
      %s122 = ssub.s32 %s20, %s27
      %p123 = scmp.eq.s32.totalorder %s122, 0
      %s125 = sadd.s32 %s124, 1
      %s126 = scalar_select %p123, %s124, %s125
      %p129 = pneg %p123
      %p130 = scmp.eq.s32.totalorder %s20, 4
      %p131 = por %p129, %p130
      %p132 = scmp.ne.s32.totalorder %s124, %s127
      %p133 = scmp.eq.s32.totalorder %s20, 0
      %p134 = por %p132, %p133
      %p135 = scmp.ne.s32.totalorder %s124, %s127
      %p136 = scmp.eq.s32.totalorder %s25, 4
      %p137 = por %p135, %p136
      %p138 = scmp.ne.s32.totalorder %s127, %s128
      %p139 = scmp.eq.s32.totalorder %s25, 0
      %p140 = por %p138, %p139
      %p141 = scmp.ne.s32.totalorder %s127, %s128
      %p142 = scmp.eq.s32.totalorder %s26, 4
      %p143 = por %p141, %p142
      %p145 = scmp.ne.s32.totalorder %s128, %s144
      %p146 = scmp.eq.s32.totalorder %s26, 0
      %p147 = por %p145, %p146
      %p148 = scmp.le.s32.totalorder 1, %s20
      %p149 = scmp.lt.s32.totalorder %s20, 6
      %p150 = pnand %p148, %p149
      %p151 = pneg %p150
      // Predicated region
      $region9: #{tpu_custom_call.1} parent=5 // pred_check
        _
      $region10: #{tpu_custom_call.1} parent=5 // pred_check_branch
        %153 = sbr.rel (%p150) target = $region12
      $region11: #{tpu_custom_call.1} parent=5 // pred_region
        %s154 = ssub.s32 %s20, 1
        // Predicated region
        $region13: #{tpu_custom_call.1} parent=11 // pred_check
          %p155 = pneg %p67
        $region14: #{tpu_custom_call.1} parent=11 // pred_check_branch
          %157 = sbr.rel (%p155) target = $region16
        $region15: #{tpu_custom_call.1} parent=11 // pred_region
          %s159 = ssub.s32 512, 512
          %160 = vsyncadd [#allocation6], %s159
          %s161 = sshll.u32 [#allocation5], 4
          %s162 = int_to_ptr.vmem [resolvable:$true] %s161
          %167 = dma.hbm_to_vmem [thread:$0]  %s1, 512, %s162, [#allocation6], 128, 128, 8
        $region16: #{tpu_custom_call.1} parent=11 // pred_fallthru
          _
        // Predicated region
        $region17: #{tpu_custom_call.1} parent=11 // pred_check
          %p168 = pneg %p88
        $region18: #{tpu_custom_call.1} parent=11 // pred_check_branch
          %170 = sbr.rel (%p168) target = $region20
        $region19: #{tpu_custom_call.1} parent=11 // pred_region
          %s172 = ssub.s32 16, 16
          %173 = vsyncadd [#allocation6], %s172
          %s175 = sshll.u32 [#allocation7], 4
          %s176 = int_to_ptr.vmem [resolvable:$true] %s175
          %178 = dma.hbm_to_vmem [thread:$0]  %s2, 16, %s176, [#allocation6]
        $region20: #{tpu_custom_call.1} parent=11 // pred_fallthru
          _
      $region12: #{tpu_custom_call.1} parent=5 // pred_fallthru
        _
      %p179 = scmp.lt.s32.totalorder %s20, 5
      // Predicated region
      $region21: #{tpu_custom_call.1} parent=5 // pred_check
        %p180 = pneg %p179
      $region22: #{tpu_custom_call.1} parent=5 // pred_check_branch
        %182 = sbr.rel (%p180) target = $region24
      $region23: #{tpu_custom_call.1} parent=5 // pred_region
        // Predicated region
        $region25: #{tpu_custom_call.1} parent=23 // pred_check
          %p183 = pneg %p40
        $region26: #{tpu_custom_call.1} parent=23 // pred_check_branch
          %185 = sbr.rel (%p183) target = $region28
        $region27: #{tpu_custom_call.1} parent=23 // pred_region
          %s186 = sand.u32 %s30, 1
          %s187 = scalar_lea.sflag [#allocation3], %s186
          %s188 = sand.u32 %s30, 1
          %s189 = smul.addr %s188, 128
          %s190 = scalar_lea.vmem [#allocation2], %s189
          %s191 = smul.u32 16, %s20
          %s193 = ssub.s32 2048, 2048
          %194 = vsyncadd %s187, %s193
          %s195 = smul.addr %s191, 128
          %s196 = scalar_lea.hbm %s0, %s195
          %s197 = sshll.u32 %s190, 4
          %s198 = int_to_ptr.vmem [resolvable:$true] %s197
          %203 = dma.hbm_to_vmem [thread:$0]  %s196, 2048, %s198, %s187, 128, 128, 8
        $region28: #{tpu_custom_call.1} parent=23 // pred_fallthru
          _
        // Predicated region
        $region29: #{tpu_custom_call.1} parent=23 // pred_check
          %p204 = pneg %p108
        $region30: #{tpu_custom_call.1} parent=23 // pred_check_branch
          %206 = sbr.rel (%p204) target = $region32
        $region31: #{tpu_custom_call.1} parent=23 // pred_region
          %s207 = sand.u32 %s98, 1
          %s208 = scalar_lea.sflag [#allocation9], %s207
          %s209 = sand.u32 %s98, 1
          %s210 = smul.addr %s209, 128
          %s211 = scalar_lea.vmem [#allocation8], %s210
          %s212 = smul.u32 16, %s20
          %s214 = ssub.s32 2048, 2048
          %215 = vsyncadd %s208, %s214
          %s216 = smul.addr %s212, 128
          %s217 = scalar_lea.hbm %s3, %s216
          %s218 = sshll.u32 %s211, 4
          %s219 = int_to_ptr.vmem [resolvable:$true] %s218
          %224 = dma.hbm_to_vmem [thread:$0]  %s217, 2048, %s219, %s208, 128, 128, 8
        $region32: #{tpu_custom_call.1} parent=23 // pred_fallthru
          _
      $region24: #{tpu_custom_call.1} parent=5 // pred_fallthru
        _
      %p225 = scmp.le.s32.totalorder 1, %s20
      %p226 = scmp.lt.s32.totalorder %s20, 6
      %p227 = pnand %p225, %p226
      %p228 = pneg %p227
      // Predicated region
      $region33: #{tpu_custom_call.1} parent=5 // pred_check
        _
      $region34: #{tpu_custom_call.1} parent=5 // pred_check_branch
        %230 = sbr.rel (%p227) target = $region36
      $region35: #{tpu_custom_call.1} parent=5 // pred_region
        %s231 = ssub.s32 %s20, 1
        %s232 = sand.u32 %s33, 1
        %s233 = scalar_lea.sflag [#allocation3], %s232
        %s234 = sand.u32 %s33, 1
        %s235 = smul.addr %s234, 128
        %s236 = scalar_lea.vmem [#allocation2], %s235
        // Predicated region
        $region37: #{tpu_custom_call.1} parent=35 // pred_check
          %p237 = pneg %p46
        $region38: #{tpu_custom_call.1} parent=35 // pred_check_branch
          %239 = sbr.rel (%p237) target = $region40
        $region39: #{tpu_custom_call.1} parent=35 // pred_region
          %240 = dma.done %s233, 2048
        $region40: #{tpu_custom_call.1} parent=35 // pred_fallthru
          _
        // Predicated region
        $region41: #{tpu_custom_call.1} parent=35 // pred_check
          %p241 = pneg %p67
        $region42: #{tpu_custom_call.1} parent=35 // pred_check_branch
          %243 = sbr.rel (%p241) target = $region44
        $region43: #{tpu_custom_call.1} parent=35 // pred_region
          %244 = dma.done [#allocation6], 512
        $region44: #{tpu_custom_call.1} parent=35 // pred_fallthru
          _
        // Predicated region
        $region45: #{tpu_custom_call.1} parent=35 // pred_check
          %p245 = pneg %p88
        $region46: #{tpu_custom_call.1} parent=35 // pred_check_branch
          %247 = sbr.rel (%p245) target = $region48
        $region47: #{tpu_custom_call.1} parent=35 // pred_region
          %248 = dma.done [#allocation6], 16
        $region48: #{tpu_custom_call.1} parent=35 // pred_fallthru
          _
        %s249 = sand.u32 %s101, 1
        %s250 = scalar_lea.sflag [#allocation9], %s249
        %s251 = sand.u32 %s101, 1
        %s252 = smul.addr %s251, 128
        %s253 = scalar_lea.vmem [#allocation8], %s252
        // Predicated region
        $region49: #{tpu_custom_call.1} parent=35 // pred_check
          %p254 = pneg %p114
        $region50: #{tpu_custom_call.1} parent=35 // pred_check_branch
          %256 = sbr.rel (%p254) target = $region52
        $region51: #{tpu_custom_call.1} parent=35 // pred_region
          %257 = dma.done %s250, 2048
        $region52: #{tpu_custom_call.1} parent=35 // pred_fallthru
          _
        %s258 = sand.u32 %s33, 1
        %s259 = scalar_lea.sflag [#allocation3], %s258
        %s260 = sand.u32 %s33, 1
        %s261 = smul.addr %s260, 128
        %s262 = scalar_lea.vmem [#allocation2], %s261
        %p263 = pneg %p46
        %p264 = pneg %p43
        %p265 = pneg %p67
        %p266 = pneg %p64
        %p267 = pneg %p88
        %p268 = pneg %p85
        %s269 = sand.u32 %s101, 1
        %s270 = scalar_lea.sflag [#allocation9], %s269
        %s271 = sand.u32 %s101, 1
        %s272 = smul.addr %s271, 128
        %s273 = scalar_lea.vmem [#allocation8], %s272
        %p274 = pneg %p114
        %p275 = pneg %p111
        %p276 = pneg %p140
        %p277 = pneg %p137
        %s278 = sand.u32 %s127, 1
        %s279 = scalar_lea.sflag [#allocation4], %s278
        %s280 = sand.u32 %s127, 1
        %s281 = smul.addr %s280, 64
        %s282 = scalar_lea.vmem [#allocation10], %s281
        %s283 = smul.u32 16, %s25
        %s284 = smul.u32 16, %s25
        %s285 = smul.u32 16, %s25
        %v287 = vld [vmem:[%s236] sm:$0xff]
        %v288 = vld [vmem:[%s236 + $0x8] sm:$0xff]
        %v289 = vld [vmem:[%s236 + $0x10] sm:$0xff]
        %v290 = vld [vmem:[%s236 + $0x18] sm:$0xff]
        %v291 = vld [vmem:[%s236 + $0x20] sm:$0xff]
        %v292 = vld [vmem:[%s236 + $0x28] sm:$0xff]
        %v293 = vld [vmem:[%s236 + $0x30] sm:$0xff]
        %v294 = vld [vmem:[%s236 + $0x38] sm:$0xff]
        %v295 = vld [vmem:[%s236 + $0x40] sm:$0xff]
        %v296 = vld [vmem:[%s236 + $0x48] sm:$0xff]
        %v297 = vld [vmem:[%s236 + $0x50] sm:$0xff]
        %v298 = vld [vmem:[%s236 + $0x58] sm:$0xff]
        %v299 = vld [vmem:[%s236 + $0x60] sm:$0xff]
        %v300 = vld [vmem:[%s236 + $0x68] sm:$0xff]
        %v301 = vld [vmem:[%s236 + $0x70] sm:$0xff]
        %v302 = vld [vmem:[%s236 + $0x78] sm:$0xff]
        %v303 = vpack.c.bf16 %v288, %v287
        %v304 = vpack.c.bf16 %v290, %v289
        %v305 = vpack.c.bf16 %v292, %v291
        %v306 = vpack.c.bf16 %v294, %v293
        %v307 = vpack.c.bf16 %v296, %v295
        %v308 = vpack.c.bf16 %v298, %v297
        %v309 = vpack.c.bf16 %v300, %v299
        %v310 = vpack.c.bf16 %v302, %v301
        %v311 = vld [vmem:[#allocation5] sm:$0xff]
        %v312 = vld [vmem:[#allocation5 + $0x8] sm:$0xff]
        %v313 = vld [vmem:[#allocation5 + $0x10] sm:$0xff]
        %v314 = vld [vmem:[#allocation5 + $0x18] sm:$0xff]
        %v315 = vpack.c.bf16 %v312, %v311
        %v316 = vpack.c.bf16 %v314, %v313
        %v317 = vld [vmem:[#allocation7] sm:$0x1]
        %v319 = vlaneseq
        %v320 = vshrl.u32 %v319, 7
        %v321 = vsub.s32 0, %v320
        %v322 = vrot.slane %v317, %v321
        %vm324 = vcmask 261120
        %v326 = vsel %vm324, %v303, 0
        %v329 = vsel %vm324, %v304, 0
        %v332 = vsel %vm324, %v305, 0
        %v335 = vsel %vm324, %v306, 0
        %v338 = vsel %vm324, %v307, 0
        %v341 = vsel %vm324, %v308, 0
        %v344 = vsel %vm324, %v309, 0
        %v347 = vsel %vm324, %v310, 0
        %349 = vmatprep.subr.bf16.mxu0 0
        %350 = vmatpush1.bf16.msra.mxu0 %v315
        %351 = vmatprep.subr.bf16.mxu0 0
        %352 = vmatpush1.bf16.msra.mxu0 %v316
        %353 = vmatprep.subr.bf16.mxu0 0
        %354 = vmatpush1.bf16.msra.mxu0 0
        %355 = vmatprep.subr.bf16.mxu0 0
        %356 = vmatpush1.bf16.msra.mxu0 0
        %357 = vmatprep.subr.bf16.mxu0 0
        %358 = vmatpush1.bf16.msra.mxu0 0
        %359 = vmatprep.subr.bf16.mxu0 0
        %360 = vmatpush1.bf16.msra.mxu0 0
        %361 = vmatprep.subr.bf16.mxu0 0
        %362 = vmatpush1.bf16.msra.mxu0 0
        %363 = vmatprep.subr.bf16.mxu0 0
        %364 = vmatpush1.bf16.msra.mxu0 0
        %365 = vmatprep.subr.bf16.mxu0 0
        %366 = vmatpush1.bf16.msra.mxu0 0
        %367 = vmatprep.subr.bf16.mxu0 0
        %368 = vmatpush1.bf16.msra.mxu0 0
        %369 = vmatprep.subr.bf16.mxu0 0
        %370 = vmatpush1.bf16.msra.mxu0 0
        %371 = vmatprep.subr.bf16.mxu0 0
        %372 = vmatpush1.bf16.msra.mxu0 0
        %373 = vmatprep.subr.bf16.mxu0 0
        %374 = vmatpush1.bf16.msra.mxu0 0
        %375 = vmatprep.subr.bf16.mxu0 0
        %376 = vmatpush1.bf16.msra.mxu0 0
        %377 = vmatprep.subr.bf16.mxu0 0
        %378 = vmatpush1.bf16.msra.mxu0 0
        %379 = vmatprep.subr.bf16.mxu0 0
        %380 = vmatpush1.bf16.msra.mxu0 0
        %381 = vmatprep.mubr.bf16.mxu0 0
        %382 = vmatmul.mubr.bf16.gmra.mrb[0].mxu0 %v326
        %v383 = vpop.f32.mrb[0].mxu0
        %v384 = vadd.f32 %v322, %v383
        %v385 = vpop.f32.mrb[0].mxu0
        %v386 = vpop.f32.mrb[0].mxu0
        %v387 = vadd.f32 %v322, %v386
        %v388 = vpop.f32.mrb[0].mxu0
        %389 = vmatprep.mubr.bf16.mxu0 0
        %390 = vmatmul.mubr.bf16.gmra.mrb[0].mxu0 %v329
        %v391 = vpop.f32.mrb[0].mxu0
        %v392 = vadd.f32 %v322, %v391
        %v393 = vpop.f32.mrb[0].mxu0
        %v394 = vpop.f32.mrb[0].mxu0
        %v395 = vadd.f32 %v322, %v394
        %v396 = vpop.f32.mrb[0].mxu0
        %397 = vmatprep.mubr.bf16.mxu0 0
        %398 = vmatmul.mubr.bf16.gmra.mrb[0].mxu0 %v332
        %v399 = vpop.f32.mrb[0].mxu0
        %v400 = vadd.f32 %v322, %v399
        %v401 = vpop.f32.mrb[0].mxu0
        %v402 = vpop.f32.mrb[0].mxu0
        %v403 = vadd.f32 %v322, %v402
        %v404 = vpop.f32.mrb[0].mxu0
        %405 = vmatprep.mubr.bf16.mxu0 0
        %406 = vmatmul.mubr.bf16.gmra.mrb[0].mxu0 %v335
        %v407 = vpop.f32.mrb[0].mxu0
        %v408 = vadd.f32 %v322, %v407
        %v409 = vpop.f32.mrb[0].mxu0
        %v410 = vpop.f32.mrb[0].mxu0
        %v411 = vadd.f32 %v322, %v410
        %v412 = vpop.f32.mrb[0].mxu0
        %413 = vmatprep.mubr.bf16.mxu0 0
        %414 = vmatmul.mubr.bf16.gmra.mrb[0].mxu0 %v338
        %v415 = vpop.f32.mrb[0].mxu0
        %v416 = vadd.f32 %v322, %v415
        %v417 = vpop.f32.mrb[0].mxu0
        %v418 = vpop.f32.mrb[0].mxu0
        %v419 = vadd.f32 %v322, %v418
        %v420 = vpop.f32.mrb[0].mxu0
        %421 = vmatprep.mubr.bf16.mxu0 0
        %422 = vmatmul.mubr.bf16.gmra.mrb[0].mxu0 %v341
        %v423 = vpop.f32.mrb[0].mxu0
        %v424 = vadd.f32 %v322, %v423
        %v425 = vpop.f32.mrb[0].mxu0
        %v426 = vpop.f32.mrb[0].mxu0
        %v427 = vadd.f32 %v322, %v426
        %v428 = vpop.f32.mrb[0].mxu0
        %429 = vmatprep.mubr.bf16.mxu0 0
        %430 = vmatmul.mubr.bf16.gmra.mrb[0].mxu0 %v344
        %v431 = vpop.f32.mrb[0].mxu0
        %v432 = vadd.f32 %v322, %v431
        %v433 = vpop.f32.mrb[0].mxu0
        %v434 = vpop.f32.mrb[0].mxu0
        %v435 = vadd.f32 %v322, %v434
        %v436 = vpop.f32.mrb[0].mxu0
        %437 = vmatprep.mubr.bf16.mxu0 0
        %438 = vmatmul.mubr.bf16.gmra.mrb[0].mxu0 %v347
        %v439 = vpop.f32.mrb[0].mxu0
        %v440 = vadd.f32 %v322, %v439
        %v441 = vpop.f32.mrb[0].mxu0
        %v442 = vpop.f32.mrb[0].mxu0
        %v443 = vadd.f32 %v322, %v442
        %v444 = vpop.f32.mrb[0].mxu0
        %445 = vdwg.mxu0
        %v446 = vld [vmem:[%s253] sm:$0xff]
        %v447 = vld [vmem:[%s253 + $0x8] sm:$0xff]
        %v448 = vld [vmem:[%s253 + $0x10] sm:$0xff]
        %v449 = vld [vmem:[%s253 + $0x18] sm:$0xff]
        %v450 = vld [vmem:[%s253 + $0x20] sm:$0xff]
        %v451 = vld [vmem:[%s253 + $0x28] sm:$0xff]
        %v452 = vld [vmem:[%s253 + $0x30] sm:$0xff]
        %v453 = vld [vmem:[%s253 + $0x38] sm:$0xff]
        %v454 = vld [vmem:[%s253 + $0x40] sm:$0xff]
        %v455 = vld [vmem:[%s253 + $0x48] sm:$0xff]
        %v456 = vld [vmem:[%s253 + $0x50] sm:$0xff]
        %v457 = vld [vmem:[%s253 + $0x58] sm:$0xff]
        %v458 = vld [vmem:[%s253 + $0x60] sm:$0xff]
        %v459 = vld [vmem:[%s253 + $0x68] sm:$0xff]
        %v460 = vld [vmem:[%s253 + $0x70] sm:$0xff]
        %v461 = vld [vmem:[%s253 + $0x78] sm:$0xff]
        %vm462 = vcmp.gt.f32.partialorder %v446, 0.5
        %vm463 = vcmp.gt.f32.partialorder %v447, 0.5
        %vm464 = vcmp.gt.f32.partialorder %v448, 0.5
        %vm465 = vcmp.gt.f32.partialorder %v449, 0.5
        %vm466 = vcmp.gt.f32.partialorder %v450, 0.5
        %vm467 = vcmp.gt.f32.partialorder %v451, 0.5
        %vm468 = vcmp.gt.f32.partialorder %v452, 0.5
        %vm469 = vcmp.gt.f32.partialorder %v453, 0.5
        %vm470 = vcmp.gt.f32.partialorder %v454, 0.5
        %vm471 = vcmp.gt.f32.partialorder %v455, 0.5
        %vm472 = vcmp.gt.f32.partialorder %v456, 0.5
        %vm473 = vcmp.gt.f32.partialorder %v457, 0.5
        %vm474 = vcmp.gt.f32.partialorder %v458, 0.5
        %vm475 = vcmp.gt.f32.partialorder %v459, 0.5
        %vm476 = vcmp.gt.f32.partialorder %v460, 0.5
        %vm477 = vcmp.gt.f32.partialorder %v461, 0.5
        %v478 = vsel %vm462, 1, 0
        %v479 = vsel %vm463, 1, 0
        %v480 = vsel %vm464, 1, 0
        %v481 = vsel %vm465, 1, 0
        %v482 = vsel %vm466, 1, 0
        %v483 = vsel %vm467, 1, 0
        %v484 = vsel %vm468, 1, 0
        %v485 = vsel %vm469, 1, 0
        %v486 = vsel %vm470, 1, 0
        %v487 = vsel %vm471, 1, 0
        %v488 = vsel %vm472, 1, 0
        %v489 = vsel %vm473, 1, 0
        %v490 = vsel %vm474, 1, 0
        %v491 = vsel %vm475, 1, 0
        %v492 = vsel %vm476, 1, 0
        %v493 = vsel %vm477, 1, 0
        %494 = vset.pattern.permute.xlu0 0
        %495 = vperm.xlu0 %494, %v478
        %v496 = vpop.permute.xlu0 %495
        %497 = vset.pattern.permute.xlu0 0
        %498 = vperm.xlu0 %497, %v479
        %v499 = vpop.permute.xlu0 %498
        %500 = vset.pattern.permute.xlu0 0
        %501 = vperm.xlu0 %500, %v480
        %v502 = vpop.permute.xlu0 %501
        %503 = vset.pattern.permute.xlu0 0
        %504 = vperm.xlu0 %503, %v481
        %v505 = vpop.permute.xlu0 %504
        %506 = vset.pattern.permute.xlu0 0
        %507 = vperm.xlu0 %506, %v482
        %v508 = vpop.permute.xlu0 %507
        %509 = vset.pattern.permute.xlu0 0
        %510 = vperm.xlu0 %509, %v483
        %v511 = vpop.permute.xlu0 %510
        %512 = vset.pattern.permute.xlu0 0
        %513 = vperm.xlu0 %512, %v484
        %v514 = vpop.permute.xlu0 %513
        %515 = vset.pattern.permute.xlu0 0
        %516 = vperm.xlu0 %515, %v485
        %v517 = vpop.permute.xlu0 %516
        %518 = vset.pattern.permute.xlu0 0
        %519 = vperm.xlu0 %518, %v486
        %v520 = vpop.permute.xlu0 %519
        %521 = vset.pattern.permute.xlu0 0
        %522 = vperm.xlu0 %521, %v487
        %v523 = vpop.permute.xlu0 %522
        %524 = vset.pattern.permute.xlu0 0
        %525 = vperm.xlu0 %524, %v488
        %v526 = vpop.permute.xlu0 %525
        %527 = vset.pattern.permute.xlu0 0
        %528 = vperm.xlu0 %527, %v489
        %v529 = vpop.permute.xlu0 %528
        %530 = vset.pattern.permute.xlu0 0
        %531 = vperm.xlu0 %530, %v490
        %v532 = vpop.permute.xlu0 %531
        %533 = vset.pattern.permute.xlu0 0
        %534 = vperm.xlu0 %533, %v491
        %v535 = vpop.permute.xlu0 %534
        %536 = vset.pattern.permute.xlu0 0
        %537 = vperm.xlu0 %536, %v492
        %v538 = vpop.permute.xlu0 %537
        %539 = vset.pattern.permute.xlu0 0
        %540 = vperm.xlu0 %539, %v493
        %v541 = vpop.permute.xlu0 %540
        %vm542 = vcmp.eq.s32.totalorder %v496, 1
        %vm543 = vcmp.eq.s32.totalorder %v499, 1
        %vm544 = vcmp.eq.s32.totalorder %v502, 1
        %vm545 = vcmp.eq.s32.totalorder %v505, 1
        %vm546 = vcmp.eq.s32.totalorder %v508, 1
        %vm547 = vcmp.eq.s32.totalorder %v511, 1
        %vm548 = vcmp.eq.s32.totalorder %v514, 1
        %vm549 = vcmp.eq.s32.totalorder %v517, 1
        %vm550 = vcmp.eq.s32.totalorder %v520, 1
        %vm551 = vcmp.eq.s32.totalorder %v523, 1
        %vm552 = vcmp.eq.s32.totalorder %v526, 1
        %vm553 = vcmp.eq.s32.totalorder %v529, 1
        %vm554 = vcmp.eq.s32.totalorder %v532, 1
        %vm555 = vcmp.eq.s32.totalorder %v535, 1
        %vm556 = vcmp.eq.s32.totalorder %v538, 1
        %vm557 = vcmp.eq.s32.totalorder %v541, 1
        %v558 = vsel %vm542, 0.0, %v384
        %v559 = vsel %vm543, 0.0, %v387
        %v560 = vsel %vm544, 0.0, %v392
        %v561 = vsel %vm545, 0.0, %v395
        %v562 = vsel %vm546, 0.0, %v400
        %v563 = vsel %vm547, 0.0, %v403
        %v564 = vsel %vm548, 0.0, %v408
        %v565 = vsel %vm549, 0.0, %v411
        %v566 = vsel %vm550, 0.0, %v416
        %v567 = vsel %vm551, 0.0, %v419
        %v568 = vsel %vm552, 0.0, %v424
        %v569 = vsel %vm553, 0.0, %v427
        %v570 = vsel %vm554, 0.0, %v432
        %v571 = vsel %vm555, 0.0, %v435
        %v572 = vsel %vm556, 0.0, %v440
        %v573 = vsel %vm557, 0.0, %v443
        %v574 = vpack.c.bf16 %v559, %v558
        %v575 = vpack.c.bf16 %v561, %v560
        %v576 = vpack.c.bf16 %v563, %v562
        %v577 = vpack.c.bf16 %v565, %v564
        %v578 = vpack.c.bf16 %v567, %v566
        %v579 = vpack.c.bf16 %v569, %v568
        %v580 = vpack.c.bf16 %v571, %v570
        %v581 = vpack.c.bf16 %v573, %v572
        %v590 = vunpack.c.l.b16 %v574
        %v591 = vunpack.c.h.b16 %v574
        %v592 = vunpack.c.l.b16 %v575
        %v593 = vunpack.c.h.b16 %v575
        %v594 = vunpack.c.l.b16 %v576
        %v595 = vunpack.c.h.b16 %v576
        %v596 = vunpack.c.l.b16 %v577
        %v597 = vunpack.c.h.b16 %v577
        %v598 = vunpack.c.l.b16 %v578
        %v599 = vunpack.c.h.b16 %v578
        %v600 = vunpack.c.l.b16 %v579
        %v601 = vunpack.c.h.b16 %v579
        %v602 = vunpack.c.l.b16 %v580
        %v603 = vunpack.c.h.b16 %v580
        %v604 = vunpack.c.l.b16 %v581
        %v605 = vunpack.c.h.b16 %v581
        %v606 = vpack.c.b16 %v590, %v590
        %v607 = vpack.c.b16 %v591, %v591
        %v608 = vpack.c.b16 %v592, %v592
        %v609 = vpack.c.b16 %v593, %v593
        %v610 = vpack.c.b16 %v594, %v594
        %v611 = vpack.c.b16 %v595, %v595
        %v612 = vpack.c.b16 %v596, %v596
        %v613 = vpack.c.b16 %v597, %v597
        %v614 = vpack.c.b16 %v598, %v598
        %v615 = vpack.c.b16 %v599, %v599
        %v616 = vpack.c.b16 %v600, %v600
        %v617 = vpack.c.b16 %v601, %v601
        %v618 = vpack.c.b16 %v602, %v602
        %v619 = vpack.c.b16 %v603, %v603
        %v620 = vpack.c.b16 %v604, %v604
        %v621 = vpack.c.b16 %v605, %v605
        %vm638 = vcmask 257024
        %639 = vst.msk [vmem:[%s282] sm:$0xf] %vm638, %v606
        %640 = vst.msk [vmem:[%s282 + $0x4] sm:$0xf] %vm638, %v607
        %641 = vst.msk [vmem:[%s282 + $0x8] sm:$0xf] %vm638, %v608
        %642 = vst.msk [vmem:[%s282 + $0xc] sm:$0xf] %vm638, %v609
        %643 = vst.msk [vmem:[%s282 + $0x10] sm:$0xf] %vm638, %v610
        %644 = vst.msk [vmem:[%s282 + $0x14] sm:$0xf] %vm638, %v611
        %645 = vst.msk [vmem:[%s282 + $0x18] sm:$0xf] %vm638, %v612
        %646 = vst.msk [vmem:[%s282 + $0x1c] sm:$0xf] %vm638, %v613
        %647 = vst.msk [vmem:[%s282 + $0x20] sm:$0xf] %vm638, %v614
        %648 = vst.msk [vmem:[%s282 + $0x24] sm:$0xf] %vm638, %v615
        %649 = vst.msk [vmem:[%s282 + $0x28] sm:$0xf] %vm638, %v616
        %650 = vst.msk [vmem:[%s282 + $0x2c] sm:$0xf] %vm638, %v617
        %651 = vst.msk [vmem:[%s282 + $0x30] sm:$0xf] %vm638, %v618
        %652 = vst.msk [vmem:[%s282 + $0x34] sm:$0xf] %vm638, %v619
        %653 = vst.msk [vmem:[%s282 + $0x38] sm:$0xf] %vm638, %v620
        %654 = vst.msk [vmem:[%s282 + $0x3c] sm:$0xf] %vm638, %v621
        %s655 = sand.u32 %s127, 1
        %s656 = scalar_lea.sflag [#allocation4], %s655
        %s657 = sand.u32 %s127, 1
        %s658 = smul.addr %s657, 64
        %s659 = scalar_lea.vmem [#allocation10], %s658
        // Predicated region
        $region53: #{tpu_custom_call.1} parent=35 // pred_check
          %p660 = pneg %p137
        $region54: #{tpu_custom_call.1} parent=35 // pred_check_branch
          %662 = sbr.rel (%p660) target = $region56
        $region55: #{tpu_custom_call.1} parent=35 // pred_region
          %s663 = smul.u32 16, %s25
          %s665 = ssub.s32 1024, 1024
          %666 = vsyncadd %s656, %s665
          %s667 = smul.addr %s663, 64
          %s668 = scalar_lea.hbm %s4, %s667
          %s669 = sshll.u32 %s659, 4
          %s670 = int_to_ptr.vmem [resolvable:$true] %s669
          %675 = dma.vmem_to_hbm [thread:$0]  %s670, 1024, %s668, %s656, 64, 64, 4
        $region56: #{tpu_custom_call.1} parent=35 // pred_fallthru
          _
      $region36: #{tpu_custom_call.1} parent=5 // pred_fallthru
        _
      %p676 = scmp.le.s32.totalorder 2, %s20
      // Predicated region
      $region57: #{tpu_custom_call.1} parent=5 // pred_check
        %p677 = pneg %p676
      $region58: #{tpu_custom_call.1} parent=5 // pred_check_branch
        %679 = sbr.rel (%p677) target = $region60
      $region59: #{tpu_custom_call.1} parent=5 // pred_region
        %s680 = ssub.s32 %s20, 2
        // Predicated region
        $region61: #{tpu_custom_call.1} parent=59 // pred_check
          %p681 = pneg %p143
        $region62: #{tpu_custom_call.1} parent=59 // pred_check_branch
          %683 = sbr.rel (%p681) target = $region64
        $region63: #{tpu_custom_call.1} parent=59 // pred_region
          %s684 = sand.u32 %s128, 1
          %s685 = scalar_lea.sflag [#allocation4], %s684
          %s686 = sand.u32 %s128, 1
          %s687 = smul.addr %s686, 64
          %s688 = scalar_lea.vmem [#allocation10], %s687
          %689 = dma.done %s685, 1024
        $region64: #{tpu_custom_call.1} parent=59 // pred_fallthru
          _
      $region60: #{tpu_custom_call.1} parent=5 // pred_fallthru
        _
    $region6: #{tpu_custom_call.1} parent=1 // loop_footer
      %s24 = sadd.s32 1, %s20
    $region7: #{tpu_custom_call.1} parent=1 // loop_footer_branch
      %19 = sbr.rel target = $region3
    $region8: #{tpu_custom_call.1} parent=1 // loop_exit
      _
    %690 = vsyncpa [#allocation3], 1
    %s691 = scalar_lea.sflag [#allocation3], 1
    %692 = vsyncpa %s691, 1
    %693 = vsyncpa [#allocation6], 1
    %694 = vsyncpa [#allocation9], 1
    %s695 = scalar_lea.sflag [#allocation9], 1
    %696 = vsyncpa %s695, 1
    %697 = vsyncpa [#allocation4], 1
    %s698 = scalar_lea.sflag [#allocation4], 1
    %699 = vsyncpa %s698, 1

</llo_original>
